<compile_context>
chip_gen: v5e
topology: v5e:2x2
jax: 0.10.0
libtpu: 0.0.40
codegen_flags: <defaults>
</compile_context>

<pallas_src>
import jax
import jax.numpy as jnp
from jax.experimental import pallas as pl
from jax.experimental.pallas import tpu as pltpu


def _make_cca_kernel(C, P, hw_real):
    """Kernel closed over channel count C, hidden planes P and the spatial size."""
    inv_hw = 1.0 / float(hw_real)

    def cca_kernel(x_ref, prm_ref, o_ref):
        x = x_ref[...]                                            # (Bb, C, HW), native dtype

        # ---- per-channel mean + population std over spatial (two-pass, f32) ----
        mean = jnp.sum(x, axis=-1, keepdims=True,
                       dtype=jnp.float32) * inv_hw                # (Bb, C, 1)
        d = x.astype(jnp.float32) - mean                          # centered (f32 working set)
        var = jnp.sum(d * d, axis=-1, keepdims=True) * inv_hw
        y = jnp.sqrt(var) + mean                                  # (Bb, C, 1)  = std + mean

        # ---- conv_du: 1x1 conv -> ReLU -> 1x1 conv -> Sigmoid (VPU/XLU only) ----
        prm = prm_ref[...]                                        # (C+1, 2P+1) packed f32
        w1t = prm[:C, :P]                                         # (C, P)  conv1 weight^T
        b1 = prm[C:C + 1, :P]                                     # (1, P)
        w2 = prm[:C, P:2 * P]                                     # (C, P)  conv2 weight
        b2 = prm[:C, 2 * P:2 * P + 1]                             # (C, 1)

        h = jnp.sum(y * w1t[None], axis=1, keepdims=True)         # (Bb, 1, P)  sublane reduce
        h = jnp.maximum(h + b1[None], 0.0)                        # ReLU
        g = jnp.sum(w2[None] * h, axis=-1, keepdims=True)         # (Bb, C, 1)  lane reduce
        gate = jax.nn.sigmoid(g + b2[None])                       # (Bb, C, 1), f32

        # ---- apply channel gate (lane-broadcast multiply in native dtype) ----
        o_ref[...] = (x * gate.astype(x.dtype)).astype(o_ref.dtype)

    return cca_kernel


def _num_tensorcores_per_device():
    """Best-effort detection of megacore chips (2 TensorCores behind one device)."""
    try:
        kind = jax.devices()[0].device_kind.lower()
    except Exception:
        return 1
    return 2 if any(tag in kind for tag in ("v4", "v5p", "v7")) else 1


def _block_vmem_bytes(bblk, C, HW, itemsize):
    """Per-step VMEM: double-buffered in+out DMA slabs plus the in-kernel f32
    working set (centered x and the gated product)."""
    blk = bblk * C * HW
    return 4 * blk * itemsize + 2 * blk * 4


def _pick_batch_block(B, C, HW, itemsize, *, target_x_bytes=2 << 20,
                      vmem_budget_bytes=24 << 20, num_cores=1,
                      max_batch_block=None):
    per_row = C * HW * itemsize
    bblk = max(1, min(B, target_x_bytes // max(per_row, 1)))
    if max_batch_block is not None:
        bblk = max(1, min(bblk, max_batch_block))
    # Respect the VMEM budget including in-kernel temporaries.
    while bblk > 1 and _block_vmem_bytes(bblk, C, HW, itemsize) > vmem_budget_bytes:
        bblk -= 1
    # Megacore chips: keep >= 2 grid steps per TensorCore (when B allows) so each
    # core's loop still overlaps prefetch/writeback.  Single-core chips: no constraint.
    if num_cores > 1:
        while bblk > 1 and pl.cdiv(B, bblk) < 2 * num_cores:
            bblk -= 1
    return bblk


def cca_layer(x, params, *, max_batch_block=None):
    """x: (B, C, H, W).  params = (w1 (P,C), b1 (P,), w2 (C,P), b2 (C,)).  Returns (B, C, H, W)."""
    w1, b1, w2, b2 = params
    B, C, H, W = x.shape
    P = w1.shape[0]
    HW = H * W

    # No spatial padding: the kernel works on the exact HW extent.
    xr = x.reshape(B, C, HW)

    # Pack the four tiny conv_du parameters into one (C+1, 2P+1) f32 array so the
    # kernel has a single constant-index parameter block (one startup DMA, one
    # padded VMEM tile pair instead of four).
    prm = jnp.zeros((C + 1, 2 * P + 1), jnp.float32)
    prm = prm.at[:C, :P].set(jnp.transpose(w1).astype(jnp.float32))
    prm = prm.at[C, :P].set(b1.astype(jnp.float32))
    prm = prm.at[:C, P:2 * P].set(w2.astype(jnp.float32))
    prm = prm.at[:C, 2 * P].set(b2.astype(jnp.float32))

    itemsize = xr.dtype.itemsize
    vmem_limit = 32 << 20      # explicit scoped limit; safe on v5e/v6e/v7x physical VMEM
    vmem_budget = 24 << 20     # headroom under the limit for params / regalloc slop
    if _block_vmem_bytes(1, C, HW, itemsize) > vmem_budget:
        # TODO(synk): HW-tiled two-phase fallback (accumulate s1/s2 over an inner HW
        # grid axis into a (bblk, C, 1) scratch, then re-read x tiles to apply the
        # gate) for slabs that do not fit v7x's 64 MiB VMEM even at batch block 1.
        raise NotImplementedError(
            "CCALayer Pallas kernel: single-image slab exceeds the VMEM budget; "
            "HW-tiled two-phase fallback not implemented.")

    bblk = _pick_batch_block(B, C, HW, itemsize,
                             vmem_budget_bytes=vmem_budget,
                             num_cores=_num_tensorcores_per_device(),
                             max_batch_block=max_batch_block)
    grid = (pl.cdiv(B, bblk),)   # ragged last block allowed; OOB rows discarded on write

    out = pl.pallas_call(
        _make_cca_kernel(C, P, HW),
        out_shape=jax.ShapeDtypeStruct((B, C, HW), x.dtype),
        grid_spec=pltpu.PrefetchScalarGridSpec(
            num_scalar_prefetch=0,
            grid=grid,
            in_specs=[
                pl.BlockSpec((bblk, C, HW), lambda b: (b, 0, 0)),        # x slab
                pl.BlockSpec((C + 1, 2 * P + 1), lambda b: (0, 0)),      # packed params
            ],
            out_specs=pl.BlockSpec((bblk, C, HW), lambda b: (b, 0, 0)),
        ),
        compiler_params=pltpu.CompilerParams(
            dimension_semantics=("parallel",),
            vmem_limit_bytes=vmem_limit),
    )(xr, prm)

    return out.reshape(B, C, H, W)


def reference(x, params):
    """Pure-JAX reference mirroring the PyTorch CCALayer forward."""
    w1, b1, w2, b2 = params
    mean = x.mean(axis=(2, 3), keepdims=True)                       # avg_pool
    var = ((x - mean) ** 2).mean(axis=(2, 3), keepdims=True)        # stdv_channels (population)
    y = jnp.sqrt(var) + mean                                        # (B, C, 1, 1)
    yv = y[:, :, 0, 0]                                              # (B, C)
    h = jnp.maximum(yv @ w1.T + b1, 0.0)                            # (B, P)
    g = jax.nn.sigmoid(h @ w2.T + b2)                               # (B, C)
    return x * g[:, :, None, None]


def init_params(key, channel, reduction=16):
    planes = max(1, channel // reduction)
    ks = jax.random.split(key, 4)
    w1 = jax.random.normal(ks[0], (planes, channel), jnp.float32) * 0.1   # conv1 (P,C,1,1)
    b1 = jax.random.normal(ks[1], (planes,), jnp.float32) * 0.01
    w2 = jax.random.normal(ks[2], (channel, planes), jnp.float32) * 0.1   # conv2 (C,P,1,1)
    b2 = jax.random.normal(ks[3], (channel,), jnp.float32) * 0.01
    return (w1, b1, w2, b2)


if __name__ == "__main__":
    key = jax.random.PRNGKey(0)
    kx1, kx2, kp = jax.random.split(key, 3)

    # channel=32 with the module's default reduction=16 -> hidden planes P=2.
    C = 32
    params = init_params(kp, channel=C, reduction=16)

    # Case 1: lane-aligned spatial size (HW = 256).
    x1 = jax.random.normal(kx1, (2, C, 16, 16), jnp.float32)
    out1 = jax.block_until_ready(cca_layer(x1, params))
    ref1 = reference(x1, params)
    assert out1.shape == x1.shape
    assert jnp.allclose(out1, ref1, atol=1e-5, rtol=1e-5), (
        f"case1 max abs err {jnp.max(jnp.abs(out1 - ref1))}")

    # Case 2: non-128-multiple spatial size (HW = 144) and a ragged batch grid
    # (B=3 with batch block 2) -- exercises the masked partial lane tile and the
    # OOB-row-discard path that replaced the pad/slice copies.
    x2 = jax.random.normal(kx2, (3, C, 12, 12), jnp.float32)
    out2 = jax.block_until_ready(cca_layer(x2, params, max_batch_block=2))
    ref2 = reference(x2, params)
    assert out2.shape == x2.shape
    assert jnp.allclose(out2, ref2, atol=1e-5, rtol=1e-5), (
        f"case2 max abs err {jnp.max(jnp.abs(out2 - ref2))}")

    print("KERNEL_OK")
</pallas_src>

<mosaic_0001>
module attributes {stable_mosaic.version = 11 : i64} {
  func.func @cca_kernel(%arg0: i32, %arg1: memref<2x32x256xf32, #tpu.memory_space<vmem>>, %arg2: memref<33x5xf32, #tpu.memory_space<vmem>>, %arg3: memref<2x32x256xf32, #tpu.memory_space<vmem>>) attributes {dimension_semantics = [#tpu.dimension_semantics<parallel>], iteration_bounds = array<i64: 1>, scalar_prefetch = 0 : i64, scratch_operands = 0 : i64, tpu.core_type = #tpu.core_type<tc>, window_params = [{transform_indices = @transform_0, window_bounds = array<i64: 2, 32, 256>}, {pipeline_mode = #tpu.pipeline_mode<synchronous>, transform_indices = @transform_1, window_bounds = array<i64: 33, 5>}, {transform_indices = @transform_2, window_bounds = array<i64: 2, 32, 256>}]} {
    %c0 = arith.constant 0 : index
    %c0_0 = arith.constant 0 : index
    %c0_1 = arith.constant 0 : index
    %0 = vector.load %arg1[%c0, %c0_0, %c0_1] : memref<2x32x256xf32, #tpu.memory_space<vmem>>, vector<2x32x256xf32>
    %cst = arith.constant dense<0.000000e+00> : vector<2x32xf32>
    %1 = vector.multi_reduction <add>, %0, %cst [2] : vector<2x32x256xf32> to vector<2x32xf32>
    %2 = vector.shape_cast %1 : vector<2x32xf32> to vector<2x32x1xf32>
    %cst_2 = arith.constant 3.906250e-03 : f32
    %3 = vector.broadcast %cst_2 : f32 to vector<2x32x1xf32>
    %4 = arith.mulf %2, %3 : vector<2x32x1xf32>
    %5 = vector.broadcast %4 : vector<2x32x1xf32> to vector<2x32x256xf32>
    %6 = arith.subf %0, %5 : vector<2x32x256xf32>
    %7 = arith.mulf %6, %6 : vector<2x32x256xf32>
    %cst_3 = arith.constant dense<0.000000e+00> : vector<2x32xf32>
    %8 = vector.multi_reduction <add>, %7, %cst_3 [2] : vector<2x32x256xf32> to vector<2x32xf32>
    %9 = vector.shape_cast %8 : vector<2x32xf32> to vector<2x32x1xf32>
    %cst_4 = arith.constant 3.906250e-03 : f32
    %10 = vector.broadcast %cst_4 : f32 to vector<2x32x1xf32>
    %11 = arith.mulf %9, %10 : vector<2x32x1xf32>
    %12 = math.sqrt %11 : vector<2x32x1xf32>
    %13 = arith.addf %12, %4 : vector<2x32x1xf32>
    %c0_5 = arith.constant 0 : index
    %c0_6 = arith.constant 0 : index
    %14 = vector.load %arg2[%c0_5, %c0_6] : memref<33x5xf32, #tpu.memory_space<vmem>>, vector<33x5xf32>
    %15 = vector.extract_strided_slice %14 {offsets = [0, 0], sizes = [32, 2], strides = [1, 1]} : vector<33x5xf32> to vector<32x2xf32>
    %16 = vector.extract_strided_slice %14 {offsets = [32, 0], sizes = [1, 2], strides = [1, 1]} : vector<33x5xf32> to vector<1x2xf32>
    %17 = vector.extract_strided_slice %14 {offsets = [0, 2], sizes = [32, 2], strides = [1, 1]} : vector<33x5xf32> to vector<32x2xf32>
    %18 = vector.extract_strided_slice %14 {offsets = [0, 4], sizes = [32, 1], strides = [1, 1]} : vector<33x5xf32> to vector<32x1xf32>
    %19 = vector.shape_cast %15 : vector<32x2xf32> to vector<1x32x2xf32>
    %20 = vector.broadcast %13 : vector<2x32x1xf32> to vector<2x32x2xf32>
    %21 = vector.broadcast %19 : vector<1x32x2xf32> to vector<2x32x2xf32>
    %22 = arith.mulf %20, %21 : vector<2x32x2xf32>
    %cst_7 = arith.constant dense<0.000000e+00> : vector<2x2xf32>
    %23 = vector.multi_reduction <add>, %22, %cst_7 [1] : vector<2x32x2xf32> to vector<2x2xf32>
    %24 = vector.shape_cast %23 : vector<2x2xf32> to vector<2x1x2xf32>
    %25 = vector.shape_cast %16 : vector<1x2xf32> to vector<1x1x2xf32>
    %26 = vector.broadcast %25 : vector<1x1x2xf32> to vector<2x1x2xf32>
    %27 = arith.addf %24, %26 : vector<2x1x2xf32>
    %cst_8 = arith.constant 0.000000e+00 : f32
    %28 = vector.broadcast %cst_8 : f32 to vector<2x1x2xf32>
    %29 = arith.maximumf %27, %28 : vector<2x1x2xf32>
    %30 = vector.shape_cast %17 : vector<32x2xf32> to vector<1x32x2xf32>
    %31 = vector.broadcast %30 : vector<1x32x2xf32> to vector<2x32x2xf32>
    %32 = vector.broadcast %29 : vector<2x1x2xf32> to vector<2x32x2xf32>
    %33 = arith.mulf %31, %32 : vector<2x32x2xf32>
    %cst_9 = arith.constant dense<0.000000e+00> : vector<2x32xf32>
    %34 = vector.multi_reduction <add>, %33, %cst_9 [2] : vector<2x32x2xf32> to vector<2x32xf32>
    %35 = vector.shape_cast %34 : vector<2x32xf32> to vector<2x32x1xf32>
    %36 = vector.shape_cast %18 : vector<32x1xf32> to vector<1x32x1xf32>
    %37 = vector.broadcast %36 : vector<1x32x1xf32> to vector<2x32x1xf32>
    %38 = arith.addf %35, %37 : vector<2x32x1xf32>
    %39 = arith.negf %38 : vector<2x32x1xf32>
    %40 = math.exp %39 : vector<2x32x1xf32>
    %cst_10 = arith.constant 1.000000e+00 : f32
    %41 = vector.broadcast %cst_10 : f32 to vector<2x32x1xf32>
    %42 = arith.addf %41, %40 : vector<2x32x1xf32>
    %43 = arith.divf %41, %42 : vector<2x32x1xf32>
    %44 = vector.broadcast %43 : vector<2x32x1xf32> to vector<2x32x256xf32>
    %45 = arith.mulf %0, %44 : vector<2x32x256xf32>
    %c0_11 = arith.constant 0 : index
    %c0_12 = arith.constant 0 : index
    %c0_13 = arith.constant 0 : index
    %46 = vector.load %arg3[%c0_11, %c0_12, %c0_13] : memref<2x32x256xf32, #tpu.memory_space<vmem>>, vector<2x32x256xf32>
    tpu.vector_store %arg3[%c0_11, %c0_12, %c0_13], %45 {strides = array<i32>} : memref<2x32x256xf32, #tpu.memory_space<vmem>>, vector<2x32x256xf32>,
    return
  }
  func.func @transform_0(%arg0: i32) -> (i32, i32, i32) {
    %c0_i32 = arith.constant 0 : i32
    %c0_i32_0 = arith.constant 0 : i32
    %c0_i32_1 = arith.constant 0 : i32
    return %arg0, %c0_i32, %c0_i32_0 : i32, i32, i32
  }
  func.func @transform_1(%arg0: i32) -> (i32, i32) {
    %c0_i32 = arith.constant 0 : i32
    %c0_i32_0 = arith.constant 0 : i32
    %c0_i32_1 = arith.constant 0 : i32
    return %c0_i32, %c0_i32_0 : i32, i32
  }
  func.func @transform_2(%arg0: i32) -> (i32, i32, i32) {
    %c0_i32 = arith.constant 0 : i32
    %c0_i32_0 = arith.constant 0 : i32
    %c0_i32_1 = arith.constant 0 : i32
    return %arg0, %c0_i32, %c0_i32_0 : i32, i32, i32
  }
}

</mosaic_0001>

<llo_original>
// kernel: tpu_custom_call.1
$region0: #{tpu_custom_call.1}
  #allocation0 [shape = 'u32[]', space=smem, size = 0x4, offset = 0x4, fixed_abs, tag = 'smem constant byte address 0x4 - core index']
  #allocation1 [shape = 'u32[72,128]{1,0:T(1,128)}', space=vmem, size = 0x9000, scoped, tag = 'internal scratch']
  %s0 = inlined_call_operand.hbm [shape: f32[2,32,256], index: 0, kind: input, shape index: {}]
  %s1 = inlined_call_operand.vmem [shape: f32[33,5], index: 1, kind: input, shape index: {}]
  %s2 = inlined_call_operand.hbm [shape: f32[2,32,256], index: 2, kind: output, shape index: {}]
  %s3 = sld [smem:[#allocation0]]
  $region22: #{tpu_custom_call.1} parent=0
    _
  %s5 = ssub.s32 1, %s3
  %s6 = scalar_select 0, %s5, %s3
  $region1: #{tpu_custom_call.1} parent=0
    #allocation2 [shape = 'u8[65536]{0}', space=vmem, size = 0x10000, scoped, tag = 'input window, operand 0, single buffered']
    #allocation3 [shape = 's32[1]{0}', space=sflag, size = 0x4, scoped, tag = 'scoped memory for tpu_custom_call.1']
    #allocation4 [shape = 's32[1]{0}', space=sflag, size = 0x4, scoped, tag = 'scoped memory for tpu_custom_call.1']
    #allocation5 [shape = 'u8[65536]{0}', space=vmem, size = 0x10000, scoped, tag = 'output window, operand 0, single buffered']
    %7 = vsyncpa [#allocation3], 0
    %8 = vsyncpa [#allocation4], 0
    // Predicated region
    $region2: #{tpu_custom_call.1} parent=1 // pred_check
      _
    $region3: #{tpu_custom_call.1} parent=1 // pred_check_branch
      %10 = sbr.rel (0) target = $region5
    $region4: #{tpu_custom_call.1} parent=1 // pred_region
      %12 = vsyncadd [#allocation3], 0
      %s13 = sshll.u32 %s0, 4
      %s14 = int_to_ptr.hbm [resolvable:$true] %s13
      %s15 = sshll.u32 [#allocation2], 4
      %s16 = int_to_ptr.vmem [resolvable:$true] %s15
      %21 = dma.hbm_to_vmem [thread:$0]  %s14, 2048, %s16, [#allocation3], 256, 256, 16
    $region5: #{tpu_custom_call.1} parent=1 // pred_fallthru
      _
    // Predicated region
    $region6: #{tpu_custom_call.1} parent=1 // pred_check
      _
    $region7: #{tpu_custom_call.1} parent=1 // pred_check_branch
      %23 = sbr.rel (0) target = $region9
    $region8: #{tpu_custom_call.1} parent=1 // pred_region
      _
    $region9: #{tpu_custom_call.1} parent=1 // pred_fallthru
      _
    // Predicated region
    $region10: #{tpu_custom_call.1} parent=1 // pred_check
      _
    $region11: #{tpu_custom_call.1} parent=1 // pred_check_branch
      %25 = sbr.rel (0) target = $region13
    $region12: #{tpu_custom_call.1} parent=1 // pred_region
      %27 = dma.done [#allocation3], 2048
    $region13: #{tpu_custom_call.1} parent=1 // pred_fallthru
      _
    %v28 = vld [vmem:[#allocation2] sm:$0xff]
    %v29 = vld [vmem:[#allocation2 + $0x8] sm:$0xff]
    %v30 = vld [vmem:[#allocation2 + $0x10] sm:$0xff]
    %v31 = vld [vmem:[#allocation2 + $0x18] sm:$0xff]
    %v32 = vld [vmem:[#allocation2 + $0x20] sm:$0xff]
    %v33 = vld [vmem:[#allocation2 + $0x28] sm:$0xff]
    %v34 = vld [vmem:[#allocation2 + $0x30] sm:$0xff]
    %v35 = vld [vmem:[#allocation2 + $0x38] sm:$0xff]
    %v36 = vld [vmem:[#allocation2 + $0x40] sm:$0xff]
    %v37 = vld [vmem:[#allocation2 + $0x48] sm:$0xff]
    %v38 = vld [vmem:[#allocation2 + $0x50] sm:$0xff]
    %v39 = vld [vmem:[#allocation2 + $0x58] sm:$0xff]
    %v40 = vld [vmem:[#allocation2 + $0x60] sm:$0xff]
    %v41 = vld [vmem:[#allocation2 + $0x68] sm:$0xff]
    %v42 = vld [vmem:[#allocation2 + $0x70] sm:$0xff]
    %v43 = vld [vmem:[#allocation2 + $0x78] sm:$0xff]
    %v44 = vadd.f32 %v28, %v29
    %45 = vadd.xlane.f32.xlu0 %v44
    %v46 = vpop.xlane.xlu0 %45
    %v47 = vadd.f32 %v30, %v31
    %48 = vadd.xlane.f32.xlu0 %v47
    %v49 = vpop.xlane.xlu0 %48
    %v50 = vadd.f32 %v32, %v33
    %51 = vadd.xlane.f32.xlu0 %v50
    %v52 = vpop.xlane.xlu0 %51
    %v53 = vadd.f32 %v34, %v35
    %54 = vadd.xlane.f32.xlu0 %v53
    %v55 = vpop.xlane.xlu0 %54
    %v56 = vadd.f32 %v36, %v37
    %57 = vadd.xlane.f32.xlu0 %v56
    %v58 = vpop.xlane.xlu0 %57
    %v59 = vadd.f32 %v38, %v39
    %60 = vadd.xlane.f32.xlu0 %v59
    %v61 = vpop.xlane.xlu0 %60
    %v62 = vadd.f32 %v40, %v41
    %63 = vadd.xlane.f32.xlu0 %v62
    %v64 = vpop.xlane.xlu0 %63
    %v65 = vadd.f32 %v42, %v43
    %66 = vadd.xlane.f32.xlu0 %v65
    %v67 = vpop.xlane.xlu0 %66
    %v68 = vmul.f32 %v46, 0.00390625
    %v69 = vmul.f32 %v49, 0.00390625
    %v70 = vmul.f32 %v52, 0.00390625
    %v71 = vmul.f32 %v55, 0.00390625
    %v72 = vmul.f32 %v58, 0.00390625
    %v73 = vmul.f32 %v61, 0.00390625
    %v74 = vmul.f32 %v64, 0.00390625
    %v75 = vmul.f32 %v67, 0.00390625
    %v76 = vsub.f32 %v28, %v68
    %v77 = vsub.f32 %v29, %v68
    %v78 = vsub.f32 %v30, %v69
    %v79 = vsub.f32 %v31, %v69
    %v80 = vsub.f32 %v32, %v70
    %v81 = vsub.f32 %v33, %v70
    %v82 = vsub.f32 %v34, %v71
    %v83 = vsub.f32 %v35, %v71
    %v84 = vsub.f32 %v36, %v72
    %v85 = vsub.f32 %v37, %v72
    %v86 = vsub.f32 %v38, %v73
    %v87 = vsub.f32 %v39, %v73
    %v88 = vsub.f32 %v40, %v74
    %v89 = vsub.f32 %v41, %v74
    %v90 = vsub.f32 %v42, %v75
    %v91 = vsub.f32 %v43, %v75
    %v92 = vmul.f32 %v76, %v76
    %v93 = vmul.f32 %v77, %v77
    %v94 = vmul.f32 %v78, %v78
    %v95 = vmul.f32 %v79, %v79
    %v96 = vmul.f32 %v80, %v80
    %v97 = vmul.f32 %v81, %v81
    %v98 = vmul.f32 %v82, %v82
    %v99 = vmul.f32 %v83, %v83
    %v100 = vmul.f32 %v84, %v84
    %v101 = vmul.f32 %v85, %v85
    %v102 = vmul.f32 %v86, %v86
    %v103 = vmul.f32 %v87, %v87
    %v104 = vmul.f32 %v88, %v88
    %v105 = vmul.f32 %v89, %v89
    %v106 = vmul.f32 %v90, %v90
    %v107 = vmul.f32 %v91, %v91
    %v108 = vadd.f32 %v92, %v93
    %109 = vadd.xlane.f32.xlu0 %v108
    %v110 = vpop.xlane.xlu0 %109
    %v111 = vadd.f32 %v94, %v95
    %112 = vadd.xlane.f32.xlu0 %v111
    %v113 = vpop.xlane.xlu0 %112
    %v114 = vadd.f32 %v96, %v97
    %115 = vadd.xlane.f32.xlu0 %v114
    %v116 = vpop.xlane.xlu0 %115
    %v117 = vadd.f32 %v98, %v99
    %118 = vadd.xlane.f32.xlu0 %v117
    %v119 = vpop.xlane.xlu0 %118
    %v120 = vadd.f32 %v100, %v101
    %121 = vadd.xlane.f32.xlu0 %v120
    %v122 = vpop.xlane.xlu0 %121
    %v123 = vadd.f32 %v102, %v103
    %124 = vadd.xlane.f32.xlu0 %v123
    %v125 = vpop.xlane.xlu0 %124
    %v126 = vadd.f32 %v104, %v105
    %127 = vadd.xlane.f32.xlu0 %v126
    %v128 = vpop.xlane.xlu0 %127
    %v129 = vadd.f32 %v106, %v107
    %130 = vadd.xlane.f32.xlu0 %v129
    %v131 = vpop.xlane.xlu0 %130
    %v132 = vmul.f32 %v110, 0.00390625
    %v133 = vmul.f32 %v113, 0.00390625
    %v134 = vmul.f32 %v116, 0.00390625
    %v135 = vmul.f32 %v119, 0.00390625
    %v136 = vmul.f32 %v122, 0.00390625
    %v137 = vmul.f32 %v125, 0.00390625
    %v138 = vmul.f32 %v128, 0.00390625
    %v139 = vmul.f32 %v131, 0.00390625
    %v140 = vrsqrt.pop %v132
    %v141 = vmul.f32 %v140, %v132
    %v142 = vmul.f32 %v141, %v140
    %v143 = vmul.f32 0.5, %v142
    %v144 = vsub.f32 1.5, %v143
    %v145 = vmul.f32 %v140, %v144
    %v146 = vmul.f32 %v132, %v145
    %vm147 = vcmp.eq.f32.partialorder %v132, inf
    %v148 = vsel %vm147, %v132, %v146
    %vm149 = vcmp.eq.f32.partialorder %v132, 0.0
    %v150 = vand.u32 %v132, 2147483648
    %v151 = vsel %vm149, %v150, %v148
    %v152 = vrsqrt.pop %v133
    %v153 = vmul.f32 %v152, %v133
    %v154 = vmul.f32 %v153, %v152
    %v155 = vmul.f32 0.5, %v154
    %v156 = vsub.f32 1.5, %v155
    %v157 = vmul.f32 %v152, %v156
    %v158 = vmul.f32 %v133, %v157
    %vm159 = vcmp.eq.f32.partialorder %v133, inf
    %v160 = vsel %vm159, %v133, %v158
    %vm161 = vcmp.eq.f32.partialorder %v133, 0.0
    %v162 = vand.u32 %v133, 2147483648
    %v163 = vsel %vm161, %v162, %v160
    %v164 = vrsqrt.pop %v134
    %v165 = vmul.f32 %v164, %v134
    %v166 = vmul.f32 %v165, %v164
    %v167 = vmul.f32 0.5, %v166
    %v168 = vsub.f32 1.5, %v167
    %v169 = vmul.f32 %v164, %v168
    %v170 = vmul.f32 %v134, %v169
    %vm171 = vcmp.eq.f32.partialorder %v134, inf
    %v172 = vsel %vm171, %v134, %v170
    %vm173 = vcmp.eq.f32.partialorder %v134, 0.0
    %v174 = vand.u32 %v134, 2147483648
    %v175 = vsel %vm173, %v174, %v172
    %v176 = vrsqrt.pop %v135
    %v177 = vmul.f32 %v176, %v135
    %v178 = vmul.f32 %v177, %v176
    %v179 = vmul.f32 0.5, %v178
    %v180 = vsub.f32 1.5, %v179
    %v181 = vmul.f32 %v176, %v180
    %v182 = vmul.f32 %v135, %v181
    %vm183 = vcmp.eq.f32.partialorder %v135, inf
    %v184 = vsel %vm183, %v135, %v182
    %vm185 = vcmp.eq.f32.partialorder %v135, 0.0
    %v186 = vand.u32 %v135, 2147483648
    %v187 = vsel %vm185, %v186, %v184
    %v188 = vrsqrt.pop %v136
    %v189 = vmul.f32 %v188, %v136
    %v190 = vmul.f32 %v189, %v188
    %v191 = vmul.f32 0.5, %v190
    %v192 = vsub.f32 1.5, %v191
    %v193 = vmul.f32 %v188, %v192
    %v194 = vmul.f32 %v136, %v193
    %vm195 = vcmp.eq.f32.partialorder %v136, inf
    %v196 = vsel %vm195, %v136, %v194
    %vm197 = vcmp.eq.f32.partialorder %v136, 0.0
    %v198 = vand.u32 %v136, 2147483648
    %v199 = vsel %vm197, %v198, %v196
    %v200 = vrsqrt.pop %v137
    %v201 = vmul.f32 %v200, %v137
    %v202 = vmul.f32 %v201, %v200
    %v203 = vmul.f32 0.5, %v202
    %v204 = vsub.f32 1.5, %v203
    %v205 = vmul.f32 %v200, %v204
    %v206 = vmul.f32 %v137, %v205
    %vm207 = vcmp.eq.f32.partialorder %v137, inf
    %v208 = vsel %vm207, %v137, %v206
    %vm209 = vcmp.eq.f32.partialorder %v137, 0.0
    %v210 = vand.u32 %v137, 2147483648
    %v211 = vsel %vm209, %v210, %v208
    %v212 = vrsqrt.pop %v138
    %v213 = vmul.f32 %v212, %v138
    %v214 = vmul.f32 %v213, %v212
    %v215 = vmul.f32 0.5, %v214
    %v216 = vsub.f32 1.5, %v215
    %v217 = vmul.f32 %v212, %v216
    %v218 = vmul.f32 %v138, %v217
    %vm219 = vcmp.eq.f32.partialorder %v138, inf
    %v220 = vsel %vm219, %v138, %v218
    %vm221 = vcmp.eq.f32.partialorder %v138, 0.0
    %v222 = vand.u32 %v138, 2147483648
    %v223 = vsel %vm221, %v222, %v220
    %v224 = vrsqrt.pop %v139
    %v225 = vmul.f32 %v224, %v139
    %v226 = vmul.f32 %v225, %v224
    %v227 = vmul.f32 0.5, %v226
    %v228 = vsub.f32 1.5, %v227
    %v229 = vmul.f32 %v224, %v228
    %v230 = vmul.f32 %v139, %v229
    %vm231 = vcmp.eq.f32.partialorder %v139, inf
    %v232 = vsel %vm231, %v139, %v230
    %vm233 = vcmp.eq.f32.partialorder %v139, 0.0
    %v234 = vand.u32 %v139, 2147483648
    %v235 = vsel %vm233, %v234, %v232
    %v236 = vadd.f32 %v151, %v68
    %v237 = vadd.f32 %v163, %v69
    %v238 = vadd.f32 %v175, %v70
    %v239 = vadd.f32 %v187, %v71
    %v240 = vadd.f32 %v199, %v72
    %v241 = vadd.f32 %v211, %v73
    %v242 = vadd.f32 %v223, %v74
    %v243 = vadd.f32 %v235, %v75
    %v244 = vld [vmem:[%s1] sm:$0xff]
    %v245 = vld [vmem:[%s1 + $0x8] sm:$0xff]
    %v246 = vld [vmem:[%s1 + $0x10] sm:$0xff]
    %v247 = vld [vmem:[%s1 + $0x18] sm:$0xff]
    %v248 = vld [vmem:[%s1 + $0x20] sm:$0x1]
    %v249 = vmul.f32 %v236, %v244
    %v250 = vmul.f32 %v237, %v245
    %v251 = vmul.f32 %v238, %v246
    %v252 = vmul.f32 %v239, %v247
    %v253 = vmul.f32 %v240, %v244
    %v254 = vmul.f32 %v241, %v245
    %v255 = vmul.f32 %v242, %v246
    %v256 = vmul.f32 %v243, %v247
    %vm257 = vcmask 15360
    %v258 = vsel %vm257, %v249, 0.0
    %v259 = vsel %vm257, %v250, 0.0
    %v260 = vadd.f32 %v258, %v259
    %v261 = vsel %vm257, %v251, 0.0
    %v262 = vadd.f32 %v260, %v261
    %v263 = vsel %vm257, %v252, 0.0
    %v264 = vadd.f32 %v262, %v263
    %v265 = vrot.slane %v264, 4
    %v266 = vadd.f32 %v264, %v265
    %v267 = vrot.slane %v266, 2
    %v268 = vadd.f32 %v266, %v267
    %v269 = vrot.slane %v268, 1
    %v270 = vadd.f32 %v268, %v269
    %v271 = vsel %vm257, %v253, 0.0
    %v272 = vsel %vm257, %v254, 0.0
    %v273 = vadd.f32 %v271, %v272
    %v274 = vsel %vm257, %v255, 0.0
    %v275 = vadd.f32 %v273, %v274
    %v276 = vsel %vm257, %v256, 0.0
    %v277 = vadd.f32 %v275, %v276
    %v278 = vrot.slane %v277, 4
    %v279 = vadd.f32 %v277, %v278
    %v280 = vrot.slane %v279, 2
    %v281 = vadd.f32 %v279, %v280
    %v282 = vrot.slane %v281, 1
    %v283 = vadd.f32 %v281, %v282
    %v284 = vadd.f32 %v270, %v248
    %v285 = vadd.f32 %v283, %v248
    %v286 = vmax.f32 %v284, 0.0
    %v287 = vmax.f32 %v285, 0.0
    %v288 = vperm.slane %v286, 0
    %v289 = vperm.slane %v287, 0
    %292 = vrot.lane.b32.xlu0 %v288, 2
    %v293 = vpop.permute.xlu0 %292
    %294 = vrot.lane.b32.xlu0 %v289, 2
    %v295 = vpop.permute.xlu0 %294
    %v298 = vmul.f32 %v244, %v293
    %v299 = vmul.f32 %v245, %v293
    %v300 = vmul.f32 %v246, %v293
    %v301 = vmul.f32 %v247, %v293
    %v302 = vmul.f32 %v244, %v295
    %v303 = vmul.f32 %v245, %v295
    %v304 = vmul.f32 %v246, %v295
    %v305 = vmul.f32 %v247, %v295
    %314 = vrot.lane.b32.xlu0 %v298, 126
    %v315 = vpop.permute.xlu0 %314
    %316 = vrot.lane.b32.xlu0 %v299, 126
    %v317 = vpop.permute.xlu0 %316
    %318 = vrot.lane.b32.xlu0 %v300, 126
    %v319 = vpop.permute.xlu0 %318
    %320 = vrot.lane.b32.xlu0 %v301, 126
    %v321 = vpop.permute.xlu0 %320
    %322 = vrot.lane.b32.xlu0 %v302, 126
    %v323 = vpop.permute.xlu0 %322
    %324 = vrot.lane.b32.xlu0 %v303, 126
    %v325 = vpop.permute.xlu0 %324
    %326 = vrot.lane.b32.xlu0 %v304, 126
    %v327 = vpop.permute.xlu0 %326
    %328 = vrot.lane.b32.xlu0 %v305, 126
    %v329 = vpop.permute.xlu0 %328
    %v338 = vsel %vm257, %v315, 0.0
    %339 = vadd.xlane.f32.xlu0 %v338
    %v340 = vpop.xlane.xlu0 %339
    %v341 = vsel %vm257, %v317, 0.0
    %342 = vadd.xlane.f32.xlu0 %v341
    %v343 = vpop.xlane.xlu0 %342
    %v344 = vsel %vm257, %v319, 0.0
    %345 = vadd.xlane.f32.xlu0 %v344
    %v346 = vpop.xlane.xlu0 %345
    %v347 = vsel %vm257, %v321, 0.0
    %348 = vadd.xlane.f32.xlu0 %v347
    %v349 = vpop.xlane.xlu0 %348
    %v350 = vsel %vm257, %v323, 0.0
    %351 = vadd.xlane.f32.xlu0 %v350
    %v352 = vpop.xlane.xlu0 %351
    %v353 = vsel %vm257, %v325, 0.0
    %354 = vadd.xlane.f32.xlu0 %v353
    %v355 = vpop.xlane.xlu0 %354
    %v356 = vsel %vm257, %v327, 0.0
    %357 = vadd.xlane.f32.xlu0 %v356
    %v358 = vpop.xlane.xlu0 %357
    %v359 = vsel %vm257, %v329, 0.0
    %360 = vadd.xlane.f32.xlu0 %v359
    %v361 = vpop.xlane.xlu0 %360
    %v362 = vadd.f32 %v340, %v244
    %v363 = vadd.f32 %v343, %v245
    %v364 = vadd.f32 %v346, %v246
    %v365 = vadd.f32 %v349, %v247
    %v366 = vadd.f32 %v352, %v244
    %v367 = vadd.f32 %v355, %v245
    %v368 = vadd.f32 %v358, %v246
    %v369 = vadd.f32 %v361, %v247
    %v370 = vxor.u32 %v362, 2147483648
    %v371 = vxor.u32 %v363, 2147483648
    %v372 = vxor.u32 %v364, 2147483648
    %v373 = vxor.u32 %v365, 2147483648
    %v374 = vxor.u32 %v366, 2147483648
    %v375 = vxor.u32 %v367, 2147483648
    %v376 = vxor.u32 %v368, 2147483648
    %v377 = vxor.u32 %v369, 2147483648
    %v378 = vmul.f32 %v370, 1.442695
    %v379 = vpow.pop %v378
    %v380 = vmul.f32 %v371, 1.442695
    %v381 = vpow.pop %v380
    %v382 = vmul.f32 %v372, 1.442695
    %v383 = vpow.pop %v382
    %v384 = vmul.f32 %v373, 1.442695
    %v385 = vpow.pop %v384
    %v386 = vmul.f32 %v374, 1.442695
    %v387 = vpow.pop %v386
    %v388 = vmul.f32 %v375, 1.442695
    %v389 = vpow.pop %v388
    %v390 = vmul.f32 %v376, 1.442695
    %v391 = vpow.pop %v390
    %v392 = vmul.f32 %v377, 1.442695
    %v393 = vpow.pop %v392
    %v394 = vadd.f32 %v379, 1.0
    %v395 = vadd.f32 %v381, 1.0
    %v396 = vadd.f32 %v383, 1.0
    %v397 = vadd.f32 %v385, 1.0
    %v398 = vadd.f32 %v387, 1.0
    %v399 = vadd.f32 %v389, 1.0
    %v400 = vadd.f32 %v391, 1.0
    %v401 = vadd.f32 %v393, 1.0
    %v402 = vrcp.pop %v394
    %v403 = vmul.f32 %v394, %v402
    %v404 = vsub.f32 1.0, %v403
    %v405 = vmul.f32 %v402, %v404
    %v406 = vadd.f32 %v402, %v405
    %vm407 = vweird.f32 %v394
    %vm408 = vweird.f32 %v402
    %vm409 = vmor %vm407, %vm408
    %v410 = vsel %vm409, %v402, %v406
    %v411 = vand.u32 2147483647, %v394
    %vm412 = vcmp.eq.f32.partialorder %v411, 8.507059e+37
    %v413 = vand.u32 %v394, 2147483648
    %v414 = vor.u32 1.1754944e-38, %v413
    %v415 = vsel %vm412, %v414, %v410
    %v416 = vmul.f32 1.0, %v415
    %v417 = vrcp.pop %v395
    %v418 = vmul.f32 %v395, %v417
    %v419 = vsub.f32 1.0, %v418
    %v420 = vmul.f32 %v417, %v419
    %v421 = vadd.f32 %v417, %v420
    %vm422 = vweird.f32 %v395
    %vm423 = vweird.f32 %v417
    %vm424 = vmor %vm422, %vm423
    %v425 = vsel %vm424, %v417, %v421
    %v426 = vand.u32 2147483647, %v395
    %vm427 = vcmp.eq.f32.partialorder %v426, 8.507059e+37
    %v428 = vand.u32 %v395, 2147483648
    %v429 = vor.u32 1.1754944e-38, %v428
    %v430 = vsel %vm427, %v429, %v425
    %v431 = vmul.f32 1.0, %v430
    %v432 = vrcp.pop %v396
    %v433 = vmul.f32 %v396, %v432
    %v434 = vsub.f32 1.0, %v433
    %v435 = vmul.f32 %v432, %v434
    %v436 = vadd.f32 %v432, %v435
    %vm437 = vweird.f32 %v396
    %vm438 = vweird.f32 %v432
    %vm439 = vmor %vm437, %vm438
    %v440 = vsel %vm439, %v432, %v436
    %v441 = vand.u32 2147483647, %v396
    %vm442 = vcmp.eq.f32.partialorder %v441, 8.507059e+37
    %v443 = vand.u32 %v396, 2147483648
    %v444 = vor.u32 1.1754944e-38, %v443
    %v445 = vsel %vm442, %v444, %v440
    %v446 = vmul.f32 1.0, %v445
    %v447 = vrcp.pop %v397
    %v448 = vmul.f32 %v397, %v447
    %v449 = vsub.f32 1.0, %v448
    %v450 = vmul.f32 %v447, %v449
    %v451 = vadd.f32 %v447, %v450
    %vm452 = vweird.f32 %v397
    %vm453 = vweird.f32 %v447
    %vm454 = vmor %vm452, %vm453
    %v455 = vsel %vm454, %v447, %v451
    %v456 = vand.u32 2147483647, %v397
    %vm457 = vcmp.eq.f32.partialorder %v456, 8.507059e+37
    %v458 = vand.u32 %v397, 2147483648
    %v459 = vor.u32 1.1754944e-38, %v458
    %v460 = vsel %vm457, %v459, %v455
    %v461 = vmul.f32 1.0, %v460
    %v462 = vrcp.pop %v398
    %v463 = vmul.f32 %v398, %v462
    %v464 = vsub.f32 1.0, %v463
    %v465 = vmul.f32 %v462, %v464
    %v466 = vadd.f32 %v462, %v465
    %vm467 = vweird.f32 %v398
    %vm468 = vweird.f32 %v462
    %vm469 = vmor %vm467, %vm468
    %v470 = vsel %vm469, %v462, %v466
    %v471 = vand.u32 2147483647, %v398
    %vm472 = vcmp.eq.f32.partialorder %v471, 8.507059e+37
    %v473 = vand.u32 %v398, 2147483648
    %v474 = vor.u32 1.1754944e-38, %v473
    %v475 = vsel %vm472, %v474, %v470
    %v476 = vmul.f32 1.0, %v475
    %v477 = vrcp.pop %v399
    %v478 = vmul.f32 %v399, %v477
    %v479 = vsub.f32 1.0, %v478
    %v480 = vmul.f32 %v477, %v479
    %v481 = vadd.f32 %v477, %v480
    %vm482 = vweird.f32 %v399
    %vm483 = vweird.f32 %v477
    %vm484 = vmor %vm482, %vm483
    %v485 = vsel %vm484, %v477, %v481
    %v486 = vand.u32 2147483647, %v399
    %vm487 = vcmp.eq.f32.partialorder %v486, 8.507059e+37
    %v488 = vand.u32 %v399, 2147483648
    %v489 = vor.u32 1.1754944e-38, %v488
    %v490 = vsel %vm487, %v489, %v485
    %v491 = vmul.f32 1.0, %v490
    %v492 = vrcp.pop %v400
    %v493 = vmul.f32 %v400, %v492
    %v494 = vsub.f32 1.0, %v493
    %v495 = vmul.f32 %v492, %v494
    %v496 = vadd.f32 %v492, %v495
    %vm497 = vweird.f32 %v400
    %vm498 = vweird.f32 %v492
    %vm499 = vmor %vm497, %vm498
    %v500 = vsel %vm499, %v492, %v496
    %v501 = vand.u32 2147483647, %v400
    %vm502 = vcmp.eq.f32.partialorder %v501, 8.507059e+37
    %v503 = vand.u32 %v400, 2147483648
    %v504 = vor.u32 1.1754944e-38, %v503
    %v505 = vsel %vm502, %v504, %v500
    %v506 = vmul.f32 1.0, %v505
    %v507 = vrcp.pop %v401
    %v508 = vmul.f32 %v401, %v507
    %v509 = vsub.f32 1.0, %v508
    %v510 = vmul.f32 %v507, %v509
    %v511 = vadd.f32 %v507, %v510
    %vm512 = vweird.f32 %v401
    %vm513 = vweird.f32 %v507
    %vm514 = vmor %vm512, %vm513
    %v515 = vsel %vm514, %v507, %v511
    %v516 = vand.u32 2147483647, %v401
    %vm517 = vcmp.eq.f32.partialorder %v516, 8.507059e+37
    %v518 = vand.u32 %v401, 2147483648
    %v519 = vor.u32 1.1754944e-38, %v518
    %v520 = vsel %vm517, %v519, %v515
    %v521 = vmul.f32 1.0, %v520
    %523 = vset.pattern.permute.xlu0 4
    %524 = vperm.xlu0 %523, %v416
    %v525 = vpop.permute.xlu0 %524
    %528 = vset.pattern.permute.xlu0 4
    %529 = vperm.xlu0 %528, %v431
    %v530 = vpop.permute.xlu0 %529
    %533 = vset.pattern.permute.xlu0 4
    %534 = vperm.xlu0 %533, %v446
    %v535 = vpop.permute.xlu0 %534
    %538 = vset.pattern.permute.xlu0 4
    %539 = vperm.xlu0 %538, %v461
    %v540 = vpop.permute.xlu0 %539
    %543 = vset.pattern.permute.xlu0 4
    %544 = vperm.xlu0 %543, %v476
    %v545 = vpop.permute.xlu0 %544
    %548 = vset.pattern.permute.xlu0 4
    %549 = vperm.xlu0 %548, %v491
    %v550 = vpop.permute.xlu0 %549
    %553 = vset.pattern.permute.xlu0 4
    %554 = vperm.xlu0 %553, %v506
    %v555 = vpop.permute.xlu0 %554
    %558 = vset.pattern.permute.xlu0 4
    %559 = vperm.xlu0 %558, %v521
    %v560 = vpop.permute.xlu0 %559
    %v562 = vmul.f32 %v28, %v525
    %v563 = vmul.f32 %v29, %v525
    %v564 = vmul.f32 %v30, %v530
    %v565 = vmul.f32 %v31, %v530
    %v566 = vmul.f32 %v32, %v535
    %v567 = vmul.f32 %v33, %v535
    %v568 = vmul.f32 %v34, %v540
    %v569 = vmul.f32 %v35, %v540
    %v570 = vmul.f32 %v36, %v545
    %v571 = vmul.f32 %v37, %v545
    %v572 = vmul.f32 %v38, %v550
    %v573 = vmul.f32 %v39, %v550
    %v574 = vmul.f32 %v40, %v555
    %v575 = vmul.f32 %v41, %v555
    %v576 = vmul.f32 %v42, %v560
    %v577 = vmul.f32 %v43, %v560
    %578 = vst [vmem:[#allocation5] sm:$0xff] %v562
    %579 = vst [vmem:[#allocation5 + $0x8] sm:$0xff] %v563
    %580 = vst [vmem:[#allocation5 + $0x10] sm:$0xff] %v564
    %581 = vst [vmem:[#allocation5 + $0x18] sm:$0xff] %v565
    %582 = vst [vmem:[#allocation5 + $0x20] sm:$0xff] %v566
    %583 = vst [vmem:[#allocation5 + $0x28] sm:$0xff] %v567
    %584 = vst [vmem:[#allocation5 + $0x30] sm:$0xff] %v568
    %585 = vst [vmem:[#allocation5 + $0x38] sm:$0xff] %v569
    %586 = vst [vmem:[#allocation5 + $0x40] sm:$0xff] %v570
    %587 = vst [vmem:[#allocation5 + $0x48] sm:$0xff] %v571
    %588 = vst [vmem:[#allocation5 + $0x50] sm:$0xff] %v572
    %589 = vst [vmem:[#allocation5 + $0x58] sm:$0xff] %v573
    %590 = vst [vmem:[#allocation5 + $0x60] sm:$0xff] %v574
    %591 = vst [vmem:[#allocation5 + $0x68] sm:$0xff] %v575
    %592 = vst [vmem:[#allocation5 + $0x70] sm:$0xff] %v576
    %593 = vst [vmem:[#allocation5 + $0x78] sm:$0xff] %v577
    // Predicated region
    $region14: #{tpu_custom_call.1} parent=1 // pred_check
      _
    $region15: #{tpu_custom_call.1} parent=1 // pred_check_branch
      %595 = sbr.rel (0) target = $region17
    $region16: #{tpu_custom_call.1} parent=1 // pred_region
      %597 = vsyncadd [#allocation4], 0
      %s598 = sshll.u32 [#allocation5], 4
      %s599 = int_to_ptr.vmem [resolvable:$true] %s598
      %s600 = sshll.u32 %s2, 4
      %s601 = int_to_ptr.hbm [resolvable:$true] %s600
      %606 = dma.vmem_to_hbm [thread:$0]  %s599, 2048, %s601, [#allocation4], 256, 256, 16
    $region17: #{tpu_custom_call.1} parent=1 // pred_fallthru
      _
    // Predicated region
    $region18: #{tpu_custom_call.1} parent=1 // pred_check
      _
    $region19: #{tpu_custom_call.1} parent=1 // pred_check_branch
      %608 = sbr.rel (0) target = $region21
    $region20: #{tpu_custom_call.1} parent=1 // pred_region
      %610 = dma.done [#allocation4], 2048
    $region21: #{tpu_custom_call.1} parent=1 // pred_fallthru
      _
    %611 = vsyncpa [#allocation3], 1
    %612 = vsyncpa [#allocation4], 1

</llo_original>
